<compile_context>
chip_gen: v7x
topology: tpu7x:2x2x1
jax: 0.10.0
libtpu: 0.0.40
codegen_flags: <defaults>
</compile_context>

<pallas_src>
import jax
import jax.numpy as jnp
from jax.experimental import pallas as pl
from jax.experimental.pallas import tpu as pltpu


def _round_up(n: int, m: int) -> int:
    return ((n + m - 1) // m) * m


def _vmem_capacity_bytes() -> int:
    """Physical VMEM per TensorCore; conservative 64 MiB fallback."""
    try:
        info = pltpu.get_tpu_info()
        cap = getattr(info, "vmem_capacity_bytes", None)
        if cap:
            return int(cap)
    except Exception:
        pass
    return 64 * 1024 * 1024


def mlp_kernel(x_ref, w1_ref, b1_ref, w2_ref, b2_ref, w3_ref, b3_ref, o_ref):
    out_size = o_ref.shape[1]
    # Cast activations to bf16 in-kernel (no wrapper-side cast pass over x).
    x = x_ref[...].astype(jnp.bfloat16)
    # Layer 1: Linear (bf16 operands, f32 accumulate) + bias/ReLU in f32.
    h = jnp.dot(x, w1_ref[...], preferred_element_type=jnp.float32)
    h = jnp.maximum(h + b1_ref[...], 0.0)
    # Layer 2: Linear + ReLU.
    h = jnp.dot(h.astype(jnp.bfloat16), w2_ref[...],
                preferred_element_type=jnp.float32)
    h = jnp.maximum(h + b2_ref[...], 0.0)
    # Output layer: padded 128-lane matmul, then slice to the true output width
    # so the HBM writeback is only out_size lanes wide.
    o = jnp.dot(h.astype(jnp.bfloat16), w3_ref[...],
                preferred_element_type=jnp.float32)
    o_ref[...] = (o[:, :out_size] + b3_ref[...]).astype(o_ref.dtype)


def prepare_params(params):
    """One-time pad + bf16 cast of weights/biases (hoisted out of the forward).

    params: (w1, b1, w2, b2, w3, b3) with weights stored (in_features, out_features).
    """
    w1, b1, w2, b2, w3, b3 = params
    in_size, hidden = w1.shape
    out_size = w3.shape[1]
    hid_p = _round_up(hidden, 128)
    out_p = _round_up(out_size, 128)

    def pad2(a, rows, cols):
        return jnp.pad(a, ((0, rows - a.shape[0]), (0, cols - a.shape[1])))

    # Zero-pad: padded K rows contribute nothing; padded N columns get zero bias
    # so they stay zero through ReLU and never reach the (unpadded) output.
    w1_p = pad2(w1, in_size, hid_p).astype(jnp.bfloat16)
    w2_p = pad2(w2, hid_p, hid_p).astype(jnp.bfloat16)
    w3_p = pad2(w3, hid_p, out_p).astype(jnp.bfloat16)
    b1_p = pad2(b1.reshape(1, -1), 1, hid_p).astype(jnp.float32)
    b2_p = pad2(b2.reshape(1, -1), 1, hid_p).astype(jnp.float32)
    b3_p = b3.reshape(1, -1).astype(jnp.float32)          # true width (no pad)
    return (w1_p, b1_p, w2_p, b2_p, w3_p, b3_p)


def mlp_forward(x, prepared_params, *, tile_b: int | None = None):
    """x: [batch, window_size, num_features] float32; params from prepare_params."""
    w1_p, b1_p, w2_p, b2_p, w3_p, b3_p = prepared_params

    batch = x.shape[0]
    x_flat = x.reshape(batch, -1)                 # torch.flatten(x, start_dim=1)
    in_size = x_flat.shape[1]
    assert in_size == w1_p.shape[0], (in_size, w1_p.shape)
    hid_p = w1_p.shape[1]
    out_p = w3_p.shape[1]
    out_size = b3_p.shape[1]

    SUBL = 8                                      # f32 sublane packing for x
    MIB = 1024 * 1024

    # Generation-aware VMEM budget with headroom (v7x: ~54 MiB of 64;
    # v5e/v6e: up to 112 MiB of 128).
    vmem_cap = _vmem_capacity_bytes()
    budget = max(16 * MIB, min(int(vmem_cap * 0.85), 112 * MIB))

    if tile_b is None:
        tile_b = 1024 if vmem_cap >= 100 * MIB else 512
    tile_b = max(SUBL, min(tile_b, _round_up(batch, SUBL)))
    tile_b = _round_up(tile_b, SUBL)

    # Resident weights/biases (default pipelining keeps 2 buffers each).
    w_bytes = 2 * ((w1_p.size + w2_p.size + w3_p.size) * 2
                   + (b1_p.size + b2_p.size + b3_p.size) * 4)

    def vmem_need(tb):
        return (2 * tb * in_size * 4        # x tile, double-buffered (f32)
                + 2 * tb * out_size * 4     # out tile, double-buffered (f32)
                + 3 * tb * hid_p * 4        # hidden activations (f32 + bf16 copies)
                + tb * out_p * 4            # padded layer-3 result before slice
                + w_bytes)

    # Auto-shrink the batch tile until the estimate fits the budget.
    while tile_b > SUBL and vmem_need(tile_b) > budget:
        tile_b = max(SUBL, _round_up(tile_b // 2, SUBL))

    # Ensure >=4 grid steps (>=2 per v7x TensorCore) when the batch allows.
    while tile_b > 128 and -(-batch // tile_b) < 4:
        tile_b = max(128, _round_up(tile_b // 2, SUBL))

    batch_p = _round_up(batch, tile_b)
    grid = (batch_p // tile_b,)

    # Pad x only along batch, and only when needed (features stay unpadded f32;
    # the bf16 cast happens inside the kernel).
    x_in = x_flat if batch_p == batch else jnp.pad(
        x_flat, ((0, batch_p - batch), (0, 0)))

    vmem_bytes = int(min(budget, max(2 * vmem_need(tile_b), 16 * MIB)))

    flops = 2 * batch_p * (in_size * hid_p + hid_p * hid_p + hid_p * out_p)
    bytes_accessed = (x_in.size * 4
                      + (w1_p.size + w2_p.size + w3_p.size) * 2
                      + (b1_p.size + b2_p.size + b3_p.size) * 4
                      + batch_p * out_size * 4)

    def resident(shape):
        # Constant index_map -> block stays VMEM-resident across grid steps.
        return pl.BlockSpec(shape, lambda i: (0, 0))

    out = pl.pallas_call(
        mlp_kernel,
        out_shape=jax.ShapeDtypeStruct((batch_p, out_size), jnp.float32),
        grid=grid,
        in_specs=[
            pl.BlockSpec((tile_b, in_size), lambda i: (i, 0)),  # x: batch-tiled f32
            resident((in_size, hid_p)), resident((1, hid_p)),   # w1, b1
            resident((hid_p, hid_p)), resident((1, hid_p)),     # w2, b2
            resident((hid_p, out_p)), resident((1, out_size)),  # w3, b3
        ],
        out_specs=pl.BlockSpec((tile_b, out_size), lambda i: (i, 0)),
        compiler_params=pltpu.CompilerParams(
            dimension_semantics=("parallel",),
            vmem_limit_bytes=vmem_bytes,
        ),
        cost_estimate=pl.CostEstimate(
            flops=flops, transcendentals=0, bytes_accessed=bytes_accessed),
    )(x_in, w1_p, b1_p, w2_p, b2_p, w3_p, b3_p)

    return out[:batch]


def init_params(key, in_size, hidden_size, out_size):
    """Deterministic init; weights stored (in, out), matching x @ W + b."""
    ks = jax.random.split(key, 6)

    def lin(kw, kb, fan_in, fan_out):
        bound = 1.0 / jnp.sqrt(fan_in)
        w = jax.random.uniform(kw, (fan_in, fan_out), jnp.float32, -bound, bound)
        b = jax.random.uniform(kb, (1, fan_out), jnp.float32, -bound, bound)
        return w, b

    w1, b1 = lin(ks[0], ks[1], in_size, hidden_size)
    w2, b2 = lin(ks[2], ks[3], hidden_size, hidden_size)
    w3, b3 = lin(ks[4], ks[5], hidden_size, out_size)
    return (w1, b1, w2, b2, w3, b3)


def reference_forward_f32(x, params):
    """Pure-JAX f32 reference of the same forward pass (eval-mode dropout)."""
    w1, b1, w2, b2, w3, b3 = params
    h = x.reshape(x.shape[0], -1)
    h = jnp.maximum(h @ w1 + b1, 0.0)
    h = jnp.maximum(h @ w2 + b2, 0.0)
    return h @ w3 + b3


def reference_forward_bf16(x, params):
    """Pure-JAX reference with the same bf16-operand / f32-accumulate scheme."""
    w1, b1, w2, b2, w3, b3 = params
    bf = jnp.bfloat16
    h = x.reshape(x.shape[0], -1).astype(bf)
    h = jnp.maximum(
        jnp.dot(h, w1.astype(bf), preferred_element_type=jnp.float32) + b1, 0.0)
    h = jnp.maximum(
        jnp.dot(h.astype(bf), w2.astype(bf),
                preferred_element_type=jnp.float32) + b2, 0.0)
    return jnp.dot(h.astype(bf), w3.astype(bf),
                   preferred_element_type=jnp.float32) + b3


if __name__ == "__main__":
    # Module hyperparameters (small, consistent with MLP.__init__):
    window_size = 8
    num_features = 4
    output_size = 1
    hidden_size = 32          # (module default is 100; small value for test)
    batch = 2

    key = jax.random.PRNGKey(0)
    kx, kp = jax.random.split(key)

    x = jax.random.normal(kx, (batch, window_size, num_features), jnp.float32)
    params = init_params(kp, window_size * num_features, hidden_size, output_size)

    prepared = prepare_params(params)          # one-time pad + bf16 cast
    out = mlp_forward(x, prepared)
    jax.block_until_ready(out)

    assert out.shape == (batch, output_size), out.shape

    # bf16-matched reference: should agree closely with the kernel.
    ref_bf16 = reference_forward_bf16(x, params)
    assert jnp.allclose(out, ref_bf16, atol=2e-2, rtol=2e-2), \
        "mismatch vs bf16-matched reference"

    # f32 reference: loose tolerance (matmul operands are bf16 in the kernel).
    ref_f32 = reference_forward_f32(x, params)
    assert jnp.allclose(out, ref_f32, atol=5e-2, rtol=5e-2), \
        "mismatch vs f32 reference"

    print("KERNEL_OK")
</pallas_src>

<mosaic_0001>
module attributes {stable_mosaic.version = 11 : i64} {
  func.func @mlp_kernel(%arg0: i32, %arg1: memref<8x32xf32, #tpu.memory_space<vmem>>, %arg2: memref<32x128xbf16, #tpu.memory_space<vmem>>, %arg3: memref<1x128xf32, #tpu.memory_space<vmem>>, %arg4: memref<128x128xbf16, #tpu.memory_space<vmem>>, %arg5: memref<1x128xf32, #tpu.memory_space<vmem>>, %arg6: memref<128x128xbf16, #tpu.memory_space<vmem>>, %arg7: memref<1x1xf32, #tpu.memory_space<vmem>>, %arg8: memref<8x1xf32, #tpu.memory_space<vmem>>) attributes {dimension_semantics = [#tpu.dimension_semantics<parallel>], iteration_bounds = array<i64: 1>, scalar_prefetch = 0 : i64, scratch_operands = 0 : i64, tpu.core_type = #tpu.core_type<tc>, window_params = [{transform_indices = @transform_0, window_bounds = array<i64: 8, 32>}, {pipeline_mode = #tpu.pipeline_mode<synchronous>, transform_indices = @transform_1, window_bounds = array<i64: 32, 128>}, {pipeline_mode = #tpu.pipeline_mode<synchronous>, transform_indices = @transform_2, window_bounds = array<i64: 1, 128>}, {pipeline_mode = #tpu.pipeline_mode<synchronous>, transform_indices = @transform_3, window_bounds = array<i64: 128, 128>}, {pipeline_mode = #tpu.pipeline_mode<synchronous>, transform_indices = @transform_4, window_bounds = array<i64: 1, 128>}, {pipeline_mode = #tpu.pipeline_mode<synchronous>, transform_indices = @transform_5, window_bounds = array<i64: 128, 128>}, {pipeline_mode = #tpu.pipeline_mode<synchronous>, transform_indices = @transform_6, window_bounds = array<i64: 1, 1>}, {transform_indices = @transform_7, window_bounds = array<i64: 8, 1>}]} {
    %c0 = arith.constant 0 : index
    %c0_0 = arith.constant 0 : index
    %0 = vector.load %arg1[%c0, %c0_0] : memref<8x32xf32, #tpu.memory_space<vmem>>, vector<8x32xf32>
    %1 = arith.truncf %0 : vector<8x32xf32> to vector<8x32xbf16>
    %c0_1 = arith.constant 0 : index
    %c0_2 = arith.constant 0 : index
    %2 = vector.load %arg2[%c0_1, %c0_2] : memref<32x128xbf16, #tpu.memory_space<vmem>>, vector<32x128xbf16>
    %cst = arith.constant dense<0.000000e+00> : vector<8x128xf32>
    %3 = tpu.matmul %1, %2, %cst {dimension_numbers = #tpu.dot_dimension_numbers<[1], [0], [0], [1], [0, 0, 1, 1], [], []>} : vector<8x32xbf16>, vector<32x128xbf16>, vector<8x128xf32> -> vector<8x128xf32>
    %c0_3 = arith.constant 0 : index
    %c0_4 = arith.constant 0 : index
    %4 = vector.load %arg3[%c0_3, %c0_4] : memref<1x128xf32, #tpu.memory_space<vmem>>, vector<1x128xf32>
    %5 = vector.broadcast %4 : vector<1x128xf32> to vector<8x128xf32>
    %6 = arith.addf %3, %5 : vector<8x128xf32>
    %cst_5 = arith.constant 0.000000e+00 : f32
    %7 = vector.broadcast %cst_5 : f32 to vector<8x128xf32>
    %8 = arith.maximumf %6, %7 : vector<8x128xf32>
    %9 = arith.truncf %8 : vector<8x128xf32> to vector<8x128xbf16>
    %c0_6 = arith.constant 0 : index
    %c0_7 = arith.constant 0 : index
    %10 = vector.load %arg4[%c0_6, %c0_7] : memref<128x128xbf16, #tpu.memory_space<vmem>>, vector<128x128xbf16>
    %cst_8 = arith.constant dense<0.000000e+00> : vector<8x128xf32>
    %11 = tpu.matmul %9, %10, %cst_8 {dimension_numbers = #tpu.dot_dimension_numbers<[1], [0], [0], [1], [0, 0, 1, 1], [], []>} : vector<8x128xbf16>, vector<128x128xbf16>, vector<8x128xf32> -> vector<8x128xf32>
    %c0_9 = arith.constant 0 : index
    %c0_10 = arith.constant 0 : index
    %12 = vector.load %arg5[%c0_9, %c0_10] : memref<1x128xf32, #tpu.memory_space<vmem>>, vector<1x128xf32>
    %13 = vector.broadcast %12 : vector<1x128xf32> to vector<8x128xf32>
    %14 = arith.addf %11, %13 : vector<8x128xf32>
    %cst_11 = arith.constant 0.000000e+00 : f32
    %15 = vector.broadcast %cst_11 : f32 to vector<8x128xf32>
    %16 = arith.maximumf %14, %15 : vector<8x128xf32>
    %17 = arith.truncf %16 : vector<8x128xf32> to vector<8x128xbf16>
    %c0_12 = arith.constant 0 : index
    %c0_13 = arith.constant 0 : index
    %18 = vector.load %arg6[%c0_12, %c0_13] : memref<128x128xbf16, #tpu.memory_space<vmem>>, vector<128x128xbf16>
    %cst_14 = arith.constant dense<0.000000e+00> : vector<8x128xf32>
    %19 = tpu.matmul %17, %18, %cst_14 {dimension_numbers = #tpu.dot_dimension_numbers<[1], [0], [0], [1], [0, 0, 1, 1], [], []>} : vector<8x128xbf16>, vector<128x128xbf16>, vector<8x128xf32> -> vector<8x128xf32>
    %20 = vector.extract_strided_slice %19 {offsets = [0, 0], sizes = [8, 1], strides = [1, 1]} : vector<8x128xf32> to vector<8x1xf32>
    %c0_15 = arith.constant 0 : index
    %c0_16 = arith.constant 0 : index
    %21 = vector.load %arg7[%c0_15, %c0_16] : memref<1x1xf32, #tpu.memory_space<vmem>>, vector<1x1xf32>
    %22 = vector.broadcast %21 : vector<1x1xf32> to vector<8x1xf32>
    %23 = arith.addf %20, %22 : vector<8x1xf32>
    %c0_17 = arith.constant 0 : index
    %c0_18 = arith.constant 0 : index
    %24 = vector.load %arg8[%c0_17, %c0_18] : memref<8x1xf32, #tpu.memory_space<vmem>>, vector<8x1xf32>
    tpu.vector_store %arg8[%c0_17, %c0_18], %23 {strides = array<i32>} : memref<8x1xf32, #tpu.memory_space<vmem>>, vector<8x1xf32>,
    return
  }
  func.func @transform_0(%arg0: i32) -> (i32, i32) {
    %c0_i32 = arith.constant 0 : i32
    %c0_i32_0 = arith.constant 0 : i32
    return %arg0, %c0_i32 : i32, i32
  }
  func.func @transform_1(%arg0: i32) -> (i32, i32) {
    %c0_i32 = arith.constant 0 : i32
    %c0_i32_0 = arith.constant 0 : i32
    %c0_i32_1 = arith.constant 0 : i32
    return %c0_i32, %c0_i32_0 : i32, i32
  }
  func.func @transform_2(%arg0: i32) -> (i32, i32) {
    %c0_i32 = arith.constant 0 : i32
    %c0_i32_0 = arith.constant 0 : i32
    %c0_i32_1 = arith.constant 0 : i32
    return %c0_i32, %c0_i32_0 : i32, i32
  }
  func.func @transform_3(%arg0: i32) -> (i32, i32) {
    %c0_i32 = arith.constant 0 : i32
    %c0_i32_0 = arith.constant 0 : i32
    %c0_i32_1 = arith.constant 0 : i32
    return %c0_i32, %c0_i32_0 : i32, i32
  }
  func.func @transform_4(%arg0: i32) -> (i32, i32) {
    %c0_i32 = arith.constant 0 : i32
    %c0_i32_0 = arith.constant 0 : i32
    %c0_i32_1 = arith.constant 0 : i32
    return %c0_i32, %c0_i32_0 : i32, i32
  }
  func.func @transform_5(%arg0: i32) -> (i32, i32) {
    %c0_i32 = arith.constant 0 : i32
    %c0_i32_0 = arith.constant 0 : i32
    %c0_i32_1 = arith.constant 0 : i32
    return %c0_i32, %c0_i32_0 : i32, i32
  }
  func.func @transform_6(%arg0: i32) -> (i32, i32) {
    %c0_i32 = arith.constant 0 : i32
    %c0_i32_0 = arith.constant 0 : i32
    %c0_i32_1 = arith.constant 0 : i32
    return %c0_i32, %c0_i32_0 : i32, i32
  }
  func.func @transform_7(%arg0: i32) -> (i32, i32) {
    %c0_i32 = arith.constant 0 : i32
    %c0_i32_0 = arith.constant 0 : i32
    return %arg0, %c0_i32 : i32, i32
  }
}

</mosaic_0001>

<llo_original>
// kernel: tpu_custom_call.1
$region0: #{tpu_custom_call.1}
  #allocation0 [shape = 'u32[]', space=smem, size = 0x4, offset = 0x4, fixed_abs, tag = 'smem constant byte address 0x4 - core index']
  #allocation1 [shape = 'u32[144,128]{1,0:T(1,128)}', space=vmem, size = 0x12000, scoped, tag = 'internal scratch']
  #allocation2 [shape = 'f32[1,1]{1,0:T(1,128)S(1)}', space=vmem, size = 0x200, scoped, tag = 'scoped memory for tpu_custom_call.1']
  %s0 = inlined_call_operand.hbm [shape: f32[8,32], index: 0, kind: input, shape index: {}]
  %s1 = inlined_call_operand.hbm [shape: bf16[32,128], index: 1, kind: input, shape index: {}]
  %s2 = inlined_call_operand.vmem [shape: f32[1,128], index: 2, kind: input, shape index: {}]
  %s3 = inlined_call_operand.hbm [shape: bf16[128,128], index: 3, kind: input, shape index: {}]
  %s4 = inlined_call_operand.vmem [shape: f32[1,128], index: 4, kind: input, shape index: {}]
  %s5 = inlined_call_operand.hbm [shape: bf16[128,128], index: 5, kind: input, shape index: {}]
  %s6 = inlined_call_operand.<no memory space> [shape: f32[1,1], index: 6, kind: input, shape index: {}]
  %s7 = inlined_call_operand.vmem [shape: f32[8,1], index: 7, kind: output, shape index: {}]
  %s8 = sld [smem:[#allocation0]]
  $region54: #{tpu_custom_call.1} parent=0
    _
  %s10 = ssub.s32 1, %s8
  %s11 = scalar_select 0, %s10, %s8
  %v12 = vstv %s6
  %13 = vst [vmem:[#allocation2] sm:$0x1] %v12
  $region1: #{tpu_custom_call.1} parent=0
    #allocation3 [shape = 'u8[4096]{0}', space=vmem, size = 0x1000, scoped, tag = 'input window, operand 0, single buffered']
    #allocation4 [shape = 's32[1]{0}', space=sflag, size = 0x4, scoped, tag = 'scoped memory for tpu_custom_call.1']
    #allocation5 [shape = 'u8[8192]{0}', space=vmem, size = 0x2000, scoped, tag = 'input window, operand 1, single buffered']
    #allocation6 [shape = 's32[1]{0}', space=sflag, size = 0x4, scoped, tag = 'scoped memory for tpu_custom_call.1']
    #allocation7 [shape = 'u8[32768]{0}', space=vmem, size = 0x8000, scoped, tag = 'input window, operand 3, single buffered']
    #allocation8 [shape = 'u8[32768]{0}', space=vmem, size = 0x8000, scoped, tag = 'input window, operand 5, single buffered']
    #allocation9 [shape = 's32[1]{0}', space=sflag, size = 0x4, scoped, tag = 'scoped memory for tpu_custom_call.1']
    %14 = vsyncpa [#allocation4], 0
    %15 = vsyncpa [#allocation6], 0
    %16 = vsyncpa [#allocation9], 0
    // Predicated region
    $region2: #{tpu_custom_call.1} parent=1 // pred_check
      _
    $region3: #{tpu_custom_call.1} parent=1 // pred_check_branch
      %18 = sbr.rel (0) target = $region5
    $region4: #{tpu_custom_call.1} parent=1 // pred_region
      %s20 = ssub.s32 128, 128
      %21 = vsyncadd [#allocation4], %s20
      %s23 = sshll.u32 [#allocation3], 4
      %s24 = int_to_ptr.vmem [resolvable:$true] %s23
      %26 = dma.hbm_to_vmem [thread:$0]  %s0, 128, %s24, [#allocation4]
    $region5: #{tpu_custom_call.1} parent=1 // pred_fallthru
      _
    // Predicated region
    $region6: #{tpu_custom_call.1} parent=1 // pred_check
      _
    $region7: #{tpu_custom_call.1} parent=1 // pred_check_branch
      %28 = sbr.rel (0) target = $region9
    $region8: #{tpu_custom_call.1} parent=1 // pred_region
      %s30 = ssub.s32 256, 256
      %31 = vsyncadd [#allocation6], %s30
      %s32 = sshll.u32 [#allocation5], 4
      %s33 = int_to_ptr.vmem [resolvable:$true] %s32
      %38 = dma.hbm_to_vmem [thread:$0]  %s1, 256, %s33, [#allocation6], 64, 64, 4
    $region9: #{tpu_custom_call.1} parent=1 // pred_fallthru
      _
    // Predicated region
    $region10: #{tpu_custom_call.1} parent=1 // pred_check
      _
    $region11: #{tpu_custom_call.1} parent=1 // pred_check_branch
      %40 = sbr.rel (0) target = $region13
    $region12: #{tpu_custom_call.1} parent=1 // pred_region
      _
    $region13: #{tpu_custom_call.1} parent=1 // pred_fallthru
      _
    // Predicated region
    $region14: #{tpu_custom_call.1} parent=1 // pred_check
      _
    $region15: #{tpu_custom_call.1} parent=1 // pred_check_branch
      %42 = sbr.rel (0) target = $region17
    $region16: #{tpu_custom_call.1} parent=1 // pred_region
      %s44 = ssub.s32 1024, 1024
      %45 = vsyncadd [#allocation6], %s44
      %s46 = sshll.u32 [#allocation7], 4
      %s47 = int_to_ptr.vmem [resolvable:$true] %s46
      %52 = dma.hbm_to_vmem [thread:$0]  %s3, 1024, %s47, [#allocation6], 64, 64, 4
    $region17: #{tpu_custom_call.1} parent=1 // pred_fallthru
      _
    // Predicated region
    $region18: #{tpu_custom_call.1} parent=1 // pred_check
      _
    $region19: #{tpu_custom_call.1} parent=1 // pred_check_branch
      %54 = sbr.rel (0) target = $region21
    $region20: #{tpu_custom_call.1} parent=1 // pred_region
      _
    $region21: #{tpu_custom_call.1} parent=1 // pred_fallthru
      _
    // Predicated region
    $region22: #{tpu_custom_call.1} parent=1 // pred_check
      _
    $region23: #{tpu_custom_call.1} parent=1 // pred_check_branch
      %56 = sbr.rel (0) target = $region25
    $region24: #{tpu_custom_call.1} parent=1 // pred_region
      %s58 = ssub.s32 1024, 1024
      %59 = vsyncadd [#allocation9], %s58
      %s60 = sshll.u32 [#allocation8], 4
      %s61 = int_to_ptr.vmem [resolvable:$true] %s60
      %66 = dma.hbm_to_vmem [thread:$0]  %s5, 1024, %s61, [#allocation9], 64, 64, 4
    $region25: #{tpu_custom_call.1} parent=1 // pred_fallthru
      _
    // Predicated region
    $region26: #{tpu_custom_call.1} parent=1 // pred_check
      _
    $region27: #{tpu_custom_call.1} parent=1 // pred_check_branch
      %68 = sbr.rel (0) target = $region29
    $region28: #{tpu_custom_call.1} parent=1 // pred_region
      _
    $region29: #{tpu_custom_call.1} parent=1 // pred_fallthru
      _
    // Predicated region
    $region30: #{tpu_custom_call.1} parent=1 // pred_check
      _
    $region31: #{tpu_custom_call.1} parent=1 // pred_check_branch
      %70 = sbr.rel (0) target = $region33
    $region32: #{tpu_custom_call.1} parent=1 // pred_region
      %71 = dma.done [#allocation4], 128
    $region33: #{tpu_custom_call.1} parent=1 // pred_fallthru
      _
    // Predicated region
    $region34: #{tpu_custom_call.1} parent=1 // pred_check
      _
    $region35: #{tpu_custom_call.1} parent=1 // pred_check_branch
      %73 = sbr.rel (0) target = $region37
    $region36: #{tpu_custom_call.1} parent=1 // pred_region
      %74 = dma.done [#allocation6], 256
    $region37: #{tpu_custom_call.1} parent=1 // pred_fallthru
      _
    // Predicated region
    $region38: #{tpu_custom_call.1} parent=1 // pred_check
      _
    $region39: #{tpu_custom_call.1} parent=1 // pred_check_branch
      %76 = sbr.rel (0) target = $region41
    $region40: #{tpu_custom_call.1} parent=1 // pred_region
      %77 = dma.done [#allocation6], 1024
    $region41: #{tpu_custom_call.1} parent=1 // pred_fallthru
      _
    // Predicated region
    $region42: #{tpu_custom_call.1} parent=1 // pred_check
      _
    $region43: #{tpu_custom_call.1} parent=1 // pred_check_branch
      %79 = sbr.rel (0) target = $region45
    $region44: #{tpu_custom_call.1} parent=1 // pred_region
      %80 = dma.done [#allocation9], 1024
    $region45: #{tpu_custom_call.1} parent=1 // pred_fallthru
      _
    %v82 = vld [vmem:[#allocation3] sm:$0xff]
    %v83 = vpack.c.bf16 %v82, %v82
    %v84 = vld [vmem:[#allocation5] sm:$0xf]
    %v85 = vld [vmem:[#allocation5 + $0x4] sm:$0xf]
    %v86 = vld [vmem:[#allocation5 + $0x8] sm:$0xf]
    %v87 = vld [vmem:[#allocation5 + $0xc] sm:$0xf]
    %v88 = vld [vmem:[%s2] sm:$0x1]
    %v90 = vlaneseq
    %v91 = vshrl.u32 %v90, 7
    %v92 = vsub.s32 0, %v91
    %v93 = vrot.slane %v88, %v92
    %v99 = vunpack.c.l.b16 %v84
    %v100 = vunpack.c.l.b16 %v85
    %v101 = vunpack.c.l.b16 %v86
    %v102 = vunpack.c.l.b16 %v87
    %v103 = vpack.c.b16 %v100, %v99
    %v104 = vpack.c.b16 %v102, %v101
    %vm107 = vcmask 261120
    %v109 = vsel %vm107, %v83, 0
    %111 = vmatprep.subr.bf16.mxu0 0
    %112 = vmatpush1.bf16.msra.mxu0 %v103
    %113 = vmatprep.subr.bf16.mxu0 0
    %114 = vmatpush1.bf16.msra.mxu0 %v104
    %115 = vmatprep.subr.bf16.mxu0 0
    %116 = vmatpush1.bf16.msra.mxu0 0
    %117 = vmatprep.subr.bf16.mxu0 0
    %118 = vmatpush1.bf16.msra.mxu0 0
    %119 = vmatprep.subr.bf16.mxu0 0
    %120 = vmatpush1.bf16.msra.mxu0 0
    %121 = vmatprep.subr.bf16.mxu0 0
    %122 = vmatpush1.bf16.msra.mxu0 0
    %123 = vmatprep.subr.bf16.mxu0 0
    %124 = vmatpush1.bf16.msra.mxu0 0
    %125 = vmatprep.subr.bf16.mxu0 0
    %126 = vmatpush1.bf16.msra.mxu0 0
    %127 = vmatprep.subr.bf16.mxu0 0
    %128 = vmatpush1.bf16.msra.mxu0 0
    %129 = vmatprep.subr.bf16.mxu0 0
    %130 = vmatpush1.bf16.msra.mxu0 0
    %131 = vmatprep.subr.bf16.mxu0 0
    %132 = vmatpush1.bf16.msra.mxu0 0
    %133 = vmatprep.subr.bf16.mxu0 0
    %134 = vmatpush1.bf16.msra.mxu0 0
    %135 = vmatprep.subr.bf16.mxu0 0
    %136 = vmatpush1.bf16.msra.mxu0 0
    %137 = vmatprep.subr.bf16.mxu0 0
    %138 = vmatpush1.bf16.msra.mxu0 0
    %139 = vmatprep.subr.bf16.mxu0 0
    %140 = vmatpush1.bf16.msra.mxu0 0
    %141 = vmatprep.subr.bf16.mxu0 0
    %142 = vmatpush1.bf16.msra.mxu0 0
    %143 = vmatprep.mubr.bf16.mxu0 0
    %144 = vmatmul.mubr.bf16.gmra.mrb[0].mxu0 %v109
    %v145 = vpop.f32.mrb[0].mxu0
    %v146 = vadd.f32 %v93, %v145
    %v147 = vpop.f32.mrb[0].mxu0
    %v148 = vpop.f32.mrb[0].mxu0
    %v149 = vpop.f32.mrb[0].mxu0
    %150 = vdwg.mxu0
    %v151 = vmax.f32 %v146, 0.0
    %v152 = vpack.c.bf16 %v151, %v151
    %v153 = vld [vmem:[#allocation7] sm:$0xf]
    %v154 = vld [vmem:[#allocation7 + $0x4] sm:$0xf]
    %v155 = vld [vmem:[#allocation7 + $0x8] sm:$0xf]
    %v156 = vld [vmem:[#allocation7 + $0xc] sm:$0xf]
    %v157 = vld [vmem:[#allocation7 + $0x10] sm:$0xf]
    %v158 = vld [vmem:[#allocation7 + $0x14] sm:$0xf]
    %v159 = vld [vmem:[#allocation7 + $0x18] sm:$0xf]
    %v160 = vld [vmem:[#allocation7 + $0x1c] sm:$0xf]
    %v161 = vld [vmem:[#allocation7 + $0x20] sm:$0xf]
    %v162 = vld [vmem:[#allocation7 + $0x24] sm:$0xf]
    %v163 = vld [vmem:[#allocation7 + $0x28] sm:$0xf]
    %v164 = vld [vmem:[#allocation7 + $0x2c] sm:$0xf]
    %v165 = vld [vmem:[#allocation7 + $0x30] sm:$0xf]
    %v166 = vld [vmem:[#allocation7 + $0x34] sm:$0xf]
    %v167 = vld [vmem:[#allocation7 + $0x38] sm:$0xf]
    %v168 = vld [vmem:[#allocation7 + $0x3c] sm:$0xf]
    %v169 = vld [vmem:[%s4] sm:$0x1]
    %v171 = vlaneseq
    %v172 = vshrl.u32 %v171, 7
    %v173 = vsub.s32 0, %v172
    %v174 = vrot.slane %v169, %v173
    %v192 = vunpack.c.l.b16 %v153
    %v193 = vunpack.c.l.b16 %v154
    %v194 = vunpack.c.l.b16 %v155
    %v195 = vunpack.c.l.b16 %v156
    %v196 = vunpack.c.l.b16 %v157
    %v197 = vunpack.c.l.b16 %v158
    %v198 = vunpack.c.l.b16 %v159
    %v199 = vunpack.c.l.b16 %v160
    %v200 = vunpack.c.l.b16 %v161
    %v201 = vunpack.c.l.b16 %v162
    %v202 = vunpack.c.l.b16 %v163
    %v203 = vunpack.c.l.b16 %v164
    %v204 = vunpack.c.l.b16 %v165
    %v205 = vunpack.c.l.b16 %v166
    %v206 = vunpack.c.l.b16 %v167
    %v207 = vunpack.c.l.b16 %v168
    %v208 = vpack.c.b16 %v193, %v192
    %v209 = vpack.c.b16 %v195, %v194
    %v210 = vpack.c.b16 %v197, %v196
    %v211 = vpack.c.b16 %v199, %v198
    %v212 = vpack.c.b16 %v201, %v200
    %v213 = vpack.c.b16 %v203, %v202
    %v214 = vpack.c.b16 %v205, %v204
    %v215 = vpack.c.b16 %v207, %v206
    %224 = vmatprep.subr.bf16.mxu0 0
    %225 = vmatpush1.bf16.msra.mxu0 %v208
    %226 = vmatprep.subr.bf16.mxu0 0
    %227 = vmatpush1.bf16.msra.mxu0 %v209
    %228 = vmatprep.subr.bf16.mxu0 0
    %229 = vmatpush1.bf16.msra.mxu0 %v210
    %230 = vmatprep.subr.bf16.mxu0 0
    %231 = vmatpush1.bf16.msra.mxu0 %v211
    %232 = vmatprep.subr.bf16.mxu0 0
    %233 = vmatpush1.bf16.msra.mxu0 %v212
    %234 = vmatprep.subr.bf16.mxu0 0
    %235 = vmatpush1.bf16.msra.mxu0 %v213
    %236 = vmatprep.subr.bf16.mxu0 0
    %237 = vmatpush1.bf16.msra.mxu0 %v214
    %238 = vmatprep.subr.bf16.mxu0 0
    %239 = vmatpush1.bf16.msra.mxu0 %v215
    %240 = vmatprep.subr.bf16.mxu0 0
    %241 = vmatpush1.bf16.msra.mxu0 0
    %242 = vmatprep.subr.bf16.mxu0 0
    %243 = vmatpush1.bf16.msra.mxu0 0
    %244 = vmatprep.subr.bf16.mxu0 0
    %245 = vmatpush1.bf16.msra.mxu0 0
    %246 = vmatprep.subr.bf16.mxu0 0
    %247 = vmatpush1.bf16.msra.mxu0 0
    %248 = vmatprep.subr.bf16.mxu0 0
    %249 = vmatpush1.bf16.msra.mxu0 0
    %250 = vmatprep.subr.bf16.mxu0 0
    %251 = vmatpush1.bf16.msra.mxu0 0
    %252 = vmatprep.subr.bf16.mxu0 0
    %253 = vmatpush1.bf16.msra.mxu0 0
    %254 = vmatprep.subr.bf16.mxu0 0
    %255 = vmatpush1.bf16.msra.mxu0 0
    %256 = vmatprep.mubr.bf16.mxu0 0
    %257 = vmatmul.mubr.bf16.gmra.mrb[0].mxu0 %v152
    %v258 = vpop.f32.mrb[0].mxu0
    %v259 = vadd.f32 %v174, %v258
    %v260 = vpop.f32.mrb[0].mxu0
    %v261 = vpop.f32.mrb[0].mxu0
    %v262 = vpop.f32.mrb[0].mxu0
    %263 = vdwg.mxu0
    %v264 = vmax.f32 %v259, 0.0
    %v265 = vpack.c.bf16 %v264, %v264
    %v266 = vld [vmem:[#allocation8] sm:$0xf]
    %v267 = vld [vmem:[#allocation8 + $0x4] sm:$0xf]
    %v268 = vld [vmem:[#allocation8 + $0x8] sm:$0xf]
    %v269 = vld [vmem:[#allocation8 + $0xc] sm:$0xf]
    %v270 = vld [vmem:[#allocation8 + $0x10] sm:$0xf]
    %v271 = vld [vmem:[#allocation8 + $0x14] sm:$0xf]
    %v272 = vld [vmem:[#allocation8 + $0x18] sm:$0xf]
    %v273 = vld [vmem:[#allocation8 + $0x1c] sm:$0xf]
    %v274 = vld [vmem:[#allocation8 + $0x20] sm:$0xf]
    %v275 = vld [vmem:[#allocation8 + $0x24] sm:$0xf]
    %v276 = vld [vmem:[#allocation8 + $0x28] sm:$0xf]
    %v277 = vld [vmem:[#allocation8 + $0x2c] sm:$0xf]
    %v278 = vld [vmem:[#allocation8 + $0x30] sm:$0xf]
    %v279 = vld [vmem:[#allocation8 + $0x34] sm:$0xf]
    %v280 = vld [vmem:[#allocation8 + $0x38] sm:$0xf]
    %v281 = vld [vmem:[#allocation8 + $0x3c] sm:$0xf]
    %v298 = vunpack.c.l.b16 %v266
    %v299 = vunpack.c.l.b16 %v267
    %v300 = vunpack.c.l.b16 %v268
    %v301 = vunpack.c.l.b16 %v269
    %v302 = vunpack.c.l.b16 %v270
    %v303 = vunpack.c.l.b16 %v271
    %v304 = vunpack.c.l.b16 %v272
    %v305 = vunpack.c.l.b16 %v273
    %v306 = vunpack.c.l.b16 %v274
    %v307 = vunpack.c.l.b16 %v275
    %v308 = vunpack.c.l.b16 %v276
    %v309 = vunpack.c.l.b16 %v277
    %v310 = vunpack.c.l.b16 %v278
    %v311 = vunpack.c.l.b16 %v279
    %v312 = vunpack.c.l.b16 %v280
    %v313 = vunpack.c.l.b16 %v281
    %v314 = vpack.c.b16 %v299, %v298
    %v315 = vpack.c.b16 %v301, %v300
    %v316 = vpack.c.b16 %v303, %v302
    %v317 = vpack.c.b16 %v305, %v304
    %v318 = vpack.c.b16 %v307, %v306
    %v319 = vpack.c.b16 %v309, %v308
    %v320 = vpack.c.b16 %v311, %v310
    %v321 = vpack.c.b16 %v313, %v312
    %330 = vmatprep.subr.bf16.mxu0 0
    %331 = vmatpush1.bf16.msra.mxu0 %v314
    %332 = vmatprep.subr.bf16.mxu0 0
    %333 = vmatpush1.bf16.msra.mxu0 %v315
    %334 = vmatprep.subr.bf16.mxu0 0
    %335 = vmatpush1.bf16.msra.mxu0 %v316
    %336 = vmatprep.subr.bf16.mxu0 0
    %337 = vmatpush1.bf16.msra.mxu0 %v317
    %338 = vmatprep.subr.bf16.mxu0 0
    %339 = vmatpush1.bf16.msra.mxu0 %v318
    %340 = vmatprep.subr.bf16.mxu0 0
    %341 = vmatpush1.bf16.msra.mxu0 %v319
    %342 = vmatprep.subr.bf16.mxu0 0
    %343 = vmatpush1.bf16.msra.mxu0 %v320
    %344 = vmatprep.subr.bf16.mxu0 0
    %345 = vmatpush1.bf16.msra.mxu0 %v321
    %346 = vmatprep.subr.bf16.mxu0 0
    %347 = vmatpush1.bf16.msra.mxu0 0
    %348 = vmatprep.subr.bf16.mxu0 0
    %349 = vmatpush1.bf16.msra.mxu0 0
    %350 = vmatprep.subr.bf16.mxu0 0
    %351 = vmatpush1.bf16.msra.mxu0 0
    %352 = vmatprep.subr.bf16.mxu0 0
    %353 = vmatpush1.bf16.msra.mxu0 0
    %354 = vmatprep.subr.bf16.mxu0 0
    %355 = vmatpush1.bf16.msra.mxu0 0
    %356 = vmatprep.subr.bf16.mxu0 0
    %357 = vmatpush1.bf16.msra.mxu0 0
    %358 = vmatprep.subr.bf16.mxu0 0
    %359 = vmatpush1.bf16.msra.mxu0 0
    %360 = vmatprep.subr.bf16.mxu0 0
    %361 = vmatpush1.bf16.msra.mxu0 0
    %362 = vmatprep.mubr.bf16.mxu0 0
    %363 = vmatmul.mubr.bf16.gmra.mrb[0].mxu0 %v265
    %v364 = vpop.f32.mrb[0].mxu0
    %v365 = vadd.f32 0.0, %v364
    %v366 = vpop.f32.mrb[0].mxu0
    %v367 = vpop.f32.mrb[0].mxu0
    %v368 = vpop.f32.mrb[0].mxu0
    %369 = vdwg.mxu0
    %v370 = vld [vmem:[#allocation2] sm:$0x1]
    %v372 = vlaneseq
    %v373 = vshrl.u32 %v372, 7
    %v374 = vsub.s32 0, %v373
    %v375 = vrot.slane %v370, %v374
    %v377 = vadd.f32 %v365, %v375
    %vm378 = vcmask 7168
    %379 = vst.msk [vmem:[%s7] sm:$0xff] %vm378, %v377
    // Predicated region
    $region46: #{tpu_custom_call.1} parent=1 // pred_check
      _
    $region47: #{tpu_custom_call.1} parent=1 // pred_check_branch
      %381 = sbr.rel (0) target = $region49
    $region48: #{tpu_custom_call.1} parent=1 // pred_region
      _
    $region49: #{tpu_custom_call.1} parent=1 // pred_fallthru
      _
    // Predicated region
    $region50: #{tpu_custom_call.1} parent=1 // pred_check
      _
    $region51: #{tpu_custom_call.1} parent=1 // pred_check_branch
      %383 = sbr.rel (0) target = $region53
    $region52: #{tpu_custom_call.1} parent=1 // pred_region
      _
    $region53: #{tpu_custom_call.1} parent=1 // pred_fallthru
      _
    %384 = vsyncpa [#allocation4], 1
    %385 = vsyncpa [#allocation6], 1
    %386 = vsyncpa [#allocation9], 1

</llo_original>
